<compile_context>
chip_gen: v7x
topology: tpu7x:2x2x1
jax: 0.10.0
libtpu: 0.0.40
codegen_flags: <defaults>
</compile_context>

<pallas_src>
import functools

import jax
import jax.numpy as jnp
from jax import lax
from jax.experimental import pallas as pl
from jax.experimental.pallas import tpu as pltpu

B, S, H, V = 2, 8, 32, 64          # batch, seq, hidden, vocab (small synthetic)
LORA_R, LORA_ALPHA = 10, 16
LORA_SCALE = LORA_ALPHA / LORA_R   # peft scaling = alpha / r
# TODO(synk): lora_dropout=0.05 is a train-time op; forward here is eval-mode (identity).

LANE = 128       # TPU lane width (last dim)
SUBLANE_F32 = 8  # f32 sublane height
BF16_PACK = 16   # one bf16 vreg is [16, 128]; row tiles should be multiples of 16


def _round_up(x, m):
    return (x + m - 1) // m * m


# ----------------------------------------------------------------------------
# Fused kernel (one grid step = one row tile of tm sequences):
#   gather last-token embeddings -> x (f32 scratch) -> bf16
#   h       = tanh(x @ W_eff)                      (bf16 MXU, f32 accumulate)
#   rewards = (V_row . h) + bias                   (f32, lane-dense [1, tm] row)
# ----------------------------------------------------------------------------
def _reward_kernel(ids_ref, embed_ref, w_ref, v_ref, bias_ref, o_ref, x_ref, *, tm):
    # ids_ref  : SMEM  int32[bp]       last-token ids, row-padded (scalar prefetch)
    # embed_ref: VMEM  f32 [V,  HP]    token embedding table (single resident copy)
    # w_ref    : VMEM  bf16[HP, HP]    merged (base + LoRA) backbone weight
    # v_ref    : VMEM  f32 [8,  HP]    value-head weight in row 0, rows 1..7 zero
    # bias_ref : SMEM  f32 [1]         value-head bias
    # o_ref    : VMEM  f32 [1, 128]    lane-dense per-tile reward row
    # x_ref    : VMEM  f32 [tm, HP]    scratch for the gathered embeddings
    base = pl.program_id(0) * tm

    # Gather this tile's last-token embedding rows from the resident table.
    # Static unroll (tm <= 128). TODO(synk): switch to a DMA gather at real size.
    for r in range(tm):
        x_ref[pl.ds(r, 1), :] = embed_ref[pl.ds(ids_ref[base + r], 1), :]

    x = x_ref[...].astype(jnp.bfloat16)                         # bf16 MXU inputs
    h = jnp.tanh(jnp.dot(x, w_ref[...],
                         preferred_element_type=jnp.float32))   # f32 acc + f32 epilogue

    # Value head as an NT contraction over HP so the per-tile rewards land lane-dense
    # ([1, tm] along the lane axis) instead of a [tm, 1] column of masked stores.
    # Kept in f32 (v5e-safe; no bf16 re-cast of h).
    r_block = lax.dot_general(v_ref[...], h, (((1,), (1,)), ((), ())),
                              preferred_element_type=jnp.float32)   # [8, tm]
    r_row = r_block[0:1, :] + bias_ref[0]                           # [1, tm]

    if tm < LANE:   # trace-time branch: only taken for tiny batches; real tiles are 128
        r_row = jnp.concatenate(
            [r_row, jnp.zeros((1, LANE - tm), jnp.float32)], axis=1)
    o_ref[...] = r_row


# ----------------------------------------------------------------------------
# One-time preparation (per checkpoint / LoRA update): merge, pad, cast.
# ----------------------------------------------------------------------------
def prepare_reward_params(params):
    h = params["w_base"].shape[0]
    assert params["value_b"].shape == (1,), "value head must be Linear(H, 1)"
    hp = _round_up(max(h, LANE), LANE)   # lane-align hidden dim

    # Eval-mode LoRA merge (exact), in f32, then one bf16 cast of the padded weight.
    w_eff = params["w_base"] + LORA_SCALE * (params["lora_a"] @ params["lora_b"])
    w_p = jnp.zeros((hp, hp), jnp.float32).at[:h, :h].set(w_eff).astype(jnp.bfloat16)

    # Embedding kept in f32 (cheap in-kernel row gather + one cast of the tile).
    embed_p = jnp.zeros((params["embed"].shape[0], hp), jnp.float32)
    embed_p = embed_p.at[:, :h].set(params["embed"])

    # Value-head row, padded to a full f32 sublane group; rows 1..7 are zero.
    v_p = jnp.zeros((SUBLANE_F32, hp), jnp.float32).at[0, :h].set(params["value_w"][0])

    bias = params["value_b"].reshape(1).astype(jnp.float32)
    return {"embed_p": embed_p, "w_p": w_p, "v_p": v_p, "bias": bias}


# ----------------------------------------------------------------------------
# Fused head: rewards = tanh(embed[last_ids] @ W_eff) @ value_w.T + value_b
# ----------------------------------------------------------------------------
def fused_reward_from_ids(prepared, last_ids):
    embed_p, w_p = prepared["embed_p"], prepared["w_p"]
    v_p, bias = prepared["v_p"], prepared["bias"]
    b = last_ids.shape[0]
    hp = embed_p.shape[1]

    # Row tile: multiple of the bf16 pack (16), fat (128) once the batch is realistic,
    # clamped so tiny batches do not over-pad. Zero-padded rows gather token 0 and are
    # sliced off after the call (exact).
    tm = min(LANE, _round_up(b, BF16_PACK))
    bp = _round_up(b, tm)
    num_tiles = bp // tm
    ids_p = jnp.zeros((bp,), jnp.int32).at[:b].set(last_ids.astype(jnp.int32))

    kernel = functools.partial(_reward_kernel, tm=tm)

    flops = 2 * bp * hp * hp + 2 * SUBLANE_F32 * bp * hp
    bytes_accessed = (embed_p.size * 4 + w_p.size * 2 + v_p.size * 4
                      + ids_p.size * 4 + num_tiles * LANE * 4)

    out = pl.pallas_call(
        kernel,
        out_shape=jax.ShapeDtypeStruct((num_tiles, LANE), jnp.float32),
        grid_spec=pltpu.PrefetchScalarGridSpec(
            num_scalar_prefetch=1,                 # last-token ids -> SMEM
            grid=(num_tiles,),
            in_specs=[
                # Whole-array, constant across the grid -> single resident copy each
                # (avoids the default double-buffering of a blocked weight spec).
                pl.BlockSpec(memory_space=pltpu.MemorySpace.VMEM),   # embedding table
                pl.BlockSpec(memory_space=pltpu.MemorySpace.VMEM),   # merged weight
                pl.BlockSpec(memory_space=pltpu.MemorySpace.VMEM),   # value-head rows
                pl.BlockSpec(memory_space=pltpu.MemorySpace.SMEM),   # bias scalar
            ],
            out_specs=pl.BlockSpec((1, LANE), lambda i, ids: (i, 0)),
            scratch_shapes=[pltpu.VMEM((tm, hp), jnp.float32)],
        ),
        compiler_params=pltpu.CompilerParams(
            # Row tiles are independent; shards across v7x's 2 TensorCores once the
            # batch is big enough for num_tiles >= 2 (no-op on 1-TC v5e/v6e).
            dimension_semantics=("parallel",),
            vmem_limit_bytes=32 * 1024 * 1024,
        ),
        cost_estimate=pl.CostEstimate(
            flops=flops, transcendentals=bp * hp, bytes_accessed=bytes_accessed),
    )(ids_p, embed_p, w_p, v_p, bias)

    # Rewards for tile i live in lanes [0, tm) of row i.
    return out[:, :tm].reshape(-1)[:b]


# ----------------------------------------------------------------------------
# Full forward: cheap index math in JAX, everything heavy in the one pallas_call.
# ----------------------------------------------------------------------------
def reward_model_forward(prepared, input_ids, attention_mask):
    b, s = input_ids.shape

    # last_token_idx = attention_mask.sum(1) - 1 ; wrap -1 -> S-1 to match PyTorch
    # negative-index semantics for all-padding rows.
    last_idx = jnp.sum(attention_mask, axis=1) - 1
    last_idx = jnp.where(last_idx < 0, last_idx + s, last_idx)

    # Only the token id per sequence is gathered here (int, tiny); the embedding row
    # gather happens inside the kernel via scalar prefetch.
    last_ids = jnp.take_along_axis(input_ids, last_idx[:, None], axis=1)[:, 0]   # [B]
    return fused_reward_from_ids(prepared, last_ids)


def reward_model_forward_ref(params, input_ids, attention_mask):
    # Pure-JAX reference in the ORIGINAL order (backbone over all tokens, then gather),
    # mirroring the kernel's bf16 MXU inputs / f32 accumulation / f32 epilogue.
    x = jnp.take(params["embed"], input_ids, axis=0)                            # [B,S,H]
    w_eff = params["w_base"] + LORA_SCALE * (params["lora_a"] @ params["lora_b"])
    hidden = jnp.tanh(jnp.dot(x.astype(jnp.bfloat16), w_eff.astype(jnp.bfloat16),
                              preferred_element_type=jnp.float32))              # [B,S,H]
    last_idx = jnp.sum(attention_mask, axis=1) - 1
    last_idx = jnp.where(last_idx < 0, last_idx + input_ids.shape[1], last_idx)
    last_hidden = hidden[jnp.arange(hidden.shape[0]), last_idx]                 # [B,H]
    return (jnp.sum(last_hidden * params["value_w"][0][None, :], axis=-1)
            + params["value_b"][0])


if __name__ == "__main__":
    key = jax.random.PRNGKey(0)
    k_emb, k_w, k_a, k_b, k_vw, k_vb, k_ids = jax.random.split(key, 7)

    params = {
        "embed":   0.02 * jax.random.normal(k_emb, (V, H), jnp.float32),
        "w_base":  0.10 * jax.random.normal(k_w, (H, H), jnp.float32),
        "lora_a":  0.10 * jax.random.normal(k_a, (H, LORA_R), jnp.float32),
        "lora_b":  0.10 * jax.random.normal(k_b, (LORA_R, H), jnp.float32),
        "value_w": 0.10 * jax.random.normal(k_vw, (1, H), jnp.float32),  # nn.Linear(H,1).weight
        "value_b": 0.10 * jax.random.normal(k_vb, (1,), jnp.float32),    # nn.Linear(H,1).bias
    }

    input_ids = jax.random.randint(k_ids, (B, S), 0, V, dtype=jnp.int32)
    lengths = jnp.array([S, S - 3], dtype=jnp.int32)                     # ragged batch
    attention_mask = (jnp.arange(S, dtype=jnp.int32)[None, :]
                      < lengths[:, None]).astype(jnp.int32)              # [B, S]

    prepared = prepare_reward_params(params)   # once per checkpoint / LoRA update
    rewards = reward_model_forward(prepared, input_ids, attention_mask)
    rewards = jax.block_until_ready(rewards)

    ref = reward_model_forward_ref(params, input_ids, attention_mask)
    assert rewards.shape == (B,)
    assert jnp.allclose(rewards, ref, atol=1e-4, rtol=1e-4), (rewards, ref)

    print("KERNEL_OK")
</pallas_src>

<mosaic_0001>
module attributes {stable_mosaic.version = 11 : i64} {
  func.func @_reward_kernel(%arg0: i32, %arg1: memref<16xi32, #tpu.memory_space<smem>>, %arg2: memref<64x128xf32, #tpu.memory_space<vmem>>, %arg3: memref<128x128xbf16, #tpu.memory_space<vmem>>, %arg4: memref<8x128xf32, #tpu.memory_space<vmem>>, %arg5: memref<1xf32, #tpu.memory_space<smem>>, %arg6: memref<1x128xf32, #tpu.memory_space<vmem>>, %arg7: memref<16x128xf32, #tpu.memory_space<vmem>>) attributes {dimension_semantics = [#tpu.dimension_semantics<parallel>], iteration_bounds = array<i64: 1>, scalar_prefetch = 1 : i64, scratch_operands = 1 : i64, tpu.core_type = #tpu.core_type<tc>, window_params = [{pipeline_mode = #tpu.pipeline_mode<synchronous>, transform_indices = @transform_0, window_bounds = array<i64: 64, 128>}, {pipeline_mode = #tpu.pipeline_mode<synchronous>, transform_indices = @transform_1, window_bounds = array<i64: 128, 128>}, {pipeline_mode = #tpu.pipeline_mode<synchronous>, transform_indices = @transform_2, window_bounds = array<i64: 8, 128>}, {transform_indices = @transform_3, window_bounds = array<i64: 1>}, {transform_indices = @transform_4, window_bounds = array<i64: 1, 128>}]} {
    %c16_i32 = arith.constant 16 : i32
    %0 = arith.muli %arg0, %c16_i32 : i32
    %c0_i32 = arith.constant 0 : i32
    %1 = arith.addi %0, %c0_i32 : i32
    %2 = arith.index_cast %1 : i32 to index
    %3 = memref.load %arg1[%2] : memref<16xi32, #tpu.memory_space<smem>>
    %4 = arith.index_cast %3 : i32 to index
    %c0 = arith.constant 0 : index
    %5 = vector.load %arg2[%4, %c0] : memref<64x128xf32, #tpu.memory_space<vmem>>, vector<1x128xf32>
    %c0_0 = arith.constant 0 : index
    %c0_1 = arith.constant 0 : index
    %6 = vector.load %arg7[%c0_0, %c0_1] : memref<16x128xf32, #tpu.memory_space<vmem>>, vector<1x128xf32>
    tpu.vector_store %arg7[%c0_0, %c0_1], %5 {strides = array<i32>} : memref<16x128xf32, #tpu.memory_space<vmem>>, vector<1x128xf32>,
    %c1_i32 = arith.constant 1 : i32
    %7 = arith.addi %0, %c1_i32 : i32
    %8 = arith.index_cast %7 : i32 to index
    %9 = memref.load %arg1[%8] : memref<16xi32, #tpu.memory_space<smem>>
    %10 = arith.index_cast %9 : i32 to index
    %c0_2 = arith.constant 0 : index
    %11 = vector.load %arg2[%10, %c0_2] : memref<64x128xf32, #tpu.memory_space<vmem>>, vector<1x128xf32>
    %c1 = arith.constant 1 : index
    %c0_3 = arith.constant 0 : index
    %12 = vector.load %arg7[%c1, %c0_3] : memref<16x128xf32, #tpu.memory_space<vmem>>, vector<1x128xf32>
    tpu.vector_store %arg7[%c1, %c0_3], %11 {strides = array<i32>} : memref<16x128xf32, #tpu.memory_space<vmem>>, vector<1x128xf32>,
    %c2_i32 = arith.constant 2 : i32
    %13 = arith.addi %0, %c2_i32 : i32
    %14 = arith.index_cast %13 : i32 to index
    %15 = memref.load %arg1[%14] : memref<16xi32, #tpu.memory_space<smem>>
    %16 = arith.index_cast %15 : i32 to index
    %c0_4 = arith.constant 0 : index
    %17 = vector.load %arg2[%16, %c0_4] : memref<64x128xf32, #tpu.memory_space<vmem>>, vector<1x128xf32>
    %c2 = arith.constant 2 : index
    %c0_5 = arith.constant 0 : index
    %18 = vector.load %arg7[%c2, %c0_5] : memref<16x128xf32, #tpu.memory_space<vmem>>, vector<1x128xf32>
    tpu.vector_store %arg7[%c2, %c0_5], %17 {strides = array<i32>} : memref<16x128xf32, #tpu.memory_space<vmem>>, vector<1x128xf32>,
    %c3_i32 = arith.constant 3 : i32
    %19 = arith.addi %0, %c3_i32 : i32
    %20 = arith.index_cast %19 : i32 to index
    %21 = memref.load %arg1[%20] : memref<16xi32, #tpu.memory_space<smem>>
    %22 = arith.index_cast %21 : i32 to index
    %c0_6 = arith.constant 0 : index
    %23 = vector.load %arg2[%22, %c0_6] : memref<64x128xf32, #tpu.memory_space<vmem>>, vector<1x128xf32>
    %c3 = arith.constant 3 : index
    %c0_7 = arith.constant 0 : index
    %24 = vector.load %arg7[%c3, %c0_7] : memref<16x128xf32, #tpu.memory_space<vmem>>, vector<1x128xf32>
    tpu.vector_store %arg7[%c3, %c0_7], %23 {strides = array<i32>} : memref<16x128xf32, #tpu.memory_space<vmem>>, vector<1x128xf32>,
    %c4_i32 = arith.constant 4 : i32
    %25 = arith.addi %0, %c4_i32 : i32
    %26 = arith.index_cast %25 : i32 to index
    %27 = memref.load %arg1[%26] : memref<16xi32, #tpu.memory_space<smem>>
    %28 = arith.index_cast %27 : i32 to index
    %c0_8 = arith.constant 0 : index
    %29 = vector.load %arg2[%28, %c0_8] : memref<64x128xf32, #tpu.memory_space<vmem>>, vector<1x128xf32>
    %c4 = arith.constant 4 : index
    %c0_9 = arith.constant 0 : index
    %30 = vector.load %arg7[%c4, %c0_9] : memref<16x128xf32, #tpu.memory_space<vmem>>, vector<1x128xf32>
    tpu.vector_store %arg7[%c4, %c0_9], %29 {strides = array<i32>} : memref<16x128xf32, #tpu.memory_space<vmem>>, vector<1x128xf32>,
    %c5_i32 = arith.constant 5 : i32
    %31 = arith.addi %0, %c5_i32 : i32
    %32 = arith.index_cast %31 : i32 to index
    %33 = memref.load %arg1[%32] : memref<16xi32, #tpu.memory_space<smem>>
    %34 = arith.index_cast %33 : i32 to index
    %c0_10 = arith.constant 0 : index
    %35 = vector.load %arg2[%34, %c0_10] : memref<64x128xf32, #tpu.memory_space<vmem>>, vector<1x128xf32>
    %c5 = arith.constant 5 : index
    %c0_11 = arith.constant 0 : index
    %36 = vector.load %arg7[%c5, %c0_11] : memref<16x128xf32, #tpu.memory_space<vmem>>, vector<1x128xf32>
    tpu.vector_store %arg7[%c5, %c0_11], %35 {strides = array<i32>} : memref<16x128xf32, #tpu.memory_space<vmem>>, vector<1x128xf32>,
    %c6_i32 = arith.constant 6 : i32
    %37 = arith.addi %0, %c6_i32 : i32
    %38 = arith.index_cast %37 : i32 to index
    %39 = memref.load %arg1[%38] : memref<16xi32, #tpu.memory_space<smem>>
    %40 = arith.index_cast %39 : i32 to index
    %c0_12 = arith.constant 0 : index
    %41 = vector.load %arg2[%40, %c0_12] : memref<64x128xf32, #tpu.memory_space<vmem>>, vector<1x128xf32>
    %c6 = arith.constant 6 : index
    %c0_13 = arith.constant 0 : index
    %42 = vector.load %arg7[%c6, %c0_13] : memref<16x128xf32, #tpu.memory_space<vmem>>, vector<1x128xf32>
    tpu.vector_store %arg7[%c6, %c0_13], %41 {strides = array<i32>} : memref<16x128xf32, #tpu.memory_space<vmem>>, vector<1x128xf32>,
    %c7_i32 = arith.constant 7 : i32
    %43 = arith.addi %0, %c7_i32 : i32
    %44 = arith.index_cast %43 : i32 to index
    %45 = memref.load %arg1[%44] : memref<16xi32, #tpu.memory_space<smem>>
    %46 = arith.index_cast %45 : i32 to index
    %c0_14 = arith.constant 0 : index
    %47 = vector.load %arg2[%46, %c0_14] : memref<64x128xf32, #tpu.memory_space<vmem>>, vector<1x128xf32>
    %c7 = arith.constant 7 : index
    %c0_15 = arith.constant 0 : index
    %48 = vector.load %arg7[%c7, %c0_15] : memref<16x128xf32, #tpu.memory_space<vmem>>, vector<1x128xf32>
    tpu.vector_store %arg7[%c7, %c0_15], %47 {strides = array<i32>} : memref<16x128xf32, #tpu.memory_space<vmem>>, vector<1x128xf32>,
    %c8_i32 = arith.constant 8 : i32
    %49 = arith.addi %0, %c8_i32 : i32
    %50 = arith.index_cast %49 : i32 to index
    %51 = memref.load %arg1[%50] : memref<16xi32, #tpu.memory_space<smem>>
    %52 = arith.index_cast %51 : i32 to index
    %c0_16 = arith.constant 0 : index
    %53 = vector.load %arg2[%52, %c0_16] : memref<64x128xf32, #tpu.memory_space<vmem>>, vector<1x128xf32>
    %c8 = arith.constant 8 : index
    %c0_17 = arith.constant 0 : index
    %54 = vector.load %arg7[%c8, %c0_17] : memref<16x128xf32, #tpu.memory_space<vmem>>, vector<1x128xf32>
    tpu.vector_store %arg7[%c8, %c0_17], %53 {strides = array<i32>} : memref<16x128xf32, #tpu.memory_space<vmem>>, vector<1x128xf32>,
    %c9_i32 = arith.constant 9 : i32
    %55 = arith.addi %0, %c9_i32 : i32
    %56 = arith.index_cast %55 : i32 to index
    %57 = memref.load %arg1[%56] : memref<16xi32, #tpu.memory_space<smem>>
    %58 = arith.index_cast %57 : i32 to index
    %c0_18 = arith.constant 0 : index
    %59 = vector.load %arg2[%58, %c0_18] : memref<64x128xf32, #tpu.memory_space<vmem>>, vector<1x128xf32>
    %c9 = arith.constant 9 : index
    %c0_19 = arith.constant 0 : index
    %60 = vector.load %arg7[%c9, %c0_19] : memref<16x128xf32, #tpu.memory_space<vmem>>, vector<1x128xf32>
    tpu.vector_store %arg7[%c9, %c0_19], %59 {strides = array<i32>} : memref<16x128xf32, #tpu.memory_space<vmem>>, vector<1x128xf32>,
    %c10_i32 = arith.constant 10 : i32
    %61 = arith.addi %0, %c10_i32 : i32
    %62 = arith.index_cast %61 : i32 to index
    %63 = memref.load %arg1[%62] : memref<16xi32, #tpu.memory_space<smem>>
    %64 = arith.index_cast %63 : i32 to index
    %c0_20 = arith.constant 0 : index
    %65 = vector.load %arg2[%64, %c0_20] : memref<64x128xf32, #tpu.memory_space<vmem>>, vector<1x128xf32>
    %c10 = arith.constant 10 : index
    %c0_21 = arith.constant 0 : index
    %66 = vector.load %arg7[%c10, %c0_21] : memref<16x128xf32, #tpu.memory_space<vmem>>, vector<1x128xf32>
    tpu.vector_store %arg7[%c10, %c0_21], %65 {strides = array<i32>} : memref<16x128xf32, #tpu.memory_space<vmem>>, vector<1x128xf32>,
    %c11_i32 = arith.constant 11 : i32
    %67 = arith.addi %0, %c11_i32 : i32
    %68 = arith.index_cast %67 : i32 to index
    %69 = memref.load %arg1[%68] : memref<16xi32, #tpu.memory_space<smem>>
    %70 = arith.index_cast %69 : i32 to index
    %c0_22 = arith.constant 0 : index
    %71 = vector.load %arg2[%70, %c0_22] : memref<64x128xf32, #tpu.memory_space<vmem>>, vector<1x128xf32>
    %c11 = arith.constant 11 : index
    %c0_23 = arith.constant 0 : index
    %72 = vector.load %arg7[%c11, %c0_23] : memref<16x128xf32, #tpu.memory_space<vmem>>, vector<1x128xf32>
    tpu.vector_store %arg7[%c11, %c0_23], %71 {strides = array<i32>} : memref<16x128xf32, #tpu.memory_space<vmem>>, vector<1x128xf32>,
    %c12_i32 = arith.constant 12 : i32
    %73 = arith.addi %0, %c12_i32 : i32
    %74 = arith.index_cast %73 : i32 to index
    %75 = memref.load %arg1[%74] : memref<16xi32, #tpu.memory_space<smem>>
    %76 = arith.index_cast %75 : i32 to index
    %c0_24 = arith.constant 0 : index
    %77 = vector.load %arg2[%76, %c0_24] : memref<64x128xf32, #tpu.memory_space<vmem>>, vector<1x128xf32>
    %c12 = arith.constant 12 : index
    %c0_25 = arith.constant 0 : index
    %78 = vector.load %arg7[%c12, %c0_25] : memref<16x128xf32, #tpu.memory_space<vmem>>, vector<1x128xf32>
    tpu.vector_store %arg7[%c12, %c0_25], %77 {strides = array<i32>} : memref<16x128xf32, #tpu.memory_space<vmem>>, vector<1x128xf32>,
    %c13_i32 = arith.constant 13 : i32
    %79 = arith.addi %0, %c13_i32 : i32
    %80 = arith.index_cast %79 : i32 to index
    %81 = memref.load %arg1[%80] : memref<16xi32, #tpu.memory_space<smem>>
    %82 = arith.index_cast %81 : i32 to index
    %c0_26 = arith.constant 0 : index
    %83 = vector.load %arg2[%82, %c0_26] : memref<64x128xf32, #tpu.memory_space<vmem>>, vector<1x128xf32>
    %c13 = arith.constant 13 : index
    %c0_27 = arith.constant 0 : index
    %84 = vector.load %arg7[%c13, %c0_27] : memref<16x128xf32, #tpu.memory_space<vmem>>, vector<1x128xf32>
    tpu.vector_store %arg7[%c13, %c0_27], %83 {strides = array<i32>} : memref<16x128xf32, #tpu.memory_space<vmem>>, vector<1x128xf32>,
    %c14_i32 = arith.constant 14 : i32
    %85 = arith.addi %0, %c14_i32 : i32
    %86 = arith.index_cast %85 : i32 to index
    %87 = memref.load %arg1[%86] : memref<16xi32, #tpu.memory_space<smem>>
    %88 = arith.index_cast %87 : i32 to index
    %c0_28 = arith.constant 0 : index
    %89 = vector.load %arg2[%88, %c0_28] : memref<64x128xf32, #tpu.memory_space<vmem>>, vector<1x128xf32>
    %c14 = arith.constant 14 : index
    %c0_29 = arith.constant 0 : index
    %90 = vector.load %arg7[%c14, %c0_29] : memref<16x128xf32, #tpu.memory_space<vmem>>, vector<1x128xf32>
    tpu.vector_store %arg7[%c14, %c0_29], %89 {strides = array<i32>} : memref<16x128xf32, #tpu.memory_space<vmem>>, vector<1x128xf32>,
    %c15_i32 = arith.constant 15 : i32
    %91 = arith.addi %0, %c15_i32 : i32
    %92 = arith.index_cast %91 : i32 to index
    %93 = memref.load %arg1[%92] : memref<16xi32, #tpu.memory_space<smem>>
    %94 = arith.index_cast %93 : i32 to index
    %c0_30 = arith.constant 0 : index
    %95 = vector.load %arg2[%94, %c0_30] : memref<64x128xf32, #tpu.memory_space<vmem>>, vector<1x128xf32>
    %c15 = arith.constant 15 : index
    %c0_31 = arith.constant 0 : index
    %96 = vector.load %arg7[%c15, %c0_31] : memref<16x128xf32, #tpu.memory_space<vmem>>, vector<1x128xf32>
    tpu.vector_store %arg7[%c15, %c0_31], %95 {strides = array<i32>} : memref<16x128xf32, #tpu.memory_space<vmem>>, vector<1x128xf32>,
    %c0_32 = arith.constant 0 : index
    %c0_33 = arith.constant 0 : index
    %97 = vector.load %arg7[%c0_32, %c0_33] : memref<16x128xf32, #tpu.memory_space<vmem>>, vector<16x128xf32>
    %98 = arith.truncf %97 : vector<16x128xf32> to vector<16x128xbf16>
    %c0_34 = arith.constant 0 : index
    %c0_35 = arith.constant 0 : index
    %99 = vector.load %arg3[%c0_34, %c0_35] : memref<128x128xbf16, #tpu.memory_space<vmem>>, vector<128x128xbf16>
    %cst = arith.constant dense<0.000000e+00> : vector<16x128xf32>
    %100 = tpu.matmul %98, %99, %cst {dimension_numbers = #tpu.dot_dimension_numbers<[1], [0], [0], [1], [0, 0, 1, 1], [], []>} : vector<16x128xbf16>, vector<128x128xbf16>, vector<16x128xf32> -> vector<16x128xf32>
    %101 = math.tanh %100 : vector<16x128xf32>
    %c0_36 = arith.constant 0 : index
    %c0_37 = arith.constant 0 : index
    %102 = vector.load %arg4[%c0_36, %c0_37] : memref<8x128xf32, #tpu.memory_space<vmem>>, vector<8x128xf32>
    %cst_38 = arith.constant dense<0.000000e+00> : vector<8x16xf32>
    %103 = tpu.matmul %102, %101, %cst_38 {dimension_numbers = #tpu.dot_dimension_numbers<[1], [1], [0], [0], [0, 0, 1, 0], [], []>} : vector<8x128xf32>, vector<16x128xf32>, vector<8x16xf32> -> vector<8x16xf32>
    %104 = vector.extract_strided_slice %103 {offsets = [0, 0], sizes = [1, 16], strides = [1, 1]} : vector<8x16xf32> to vector<1x16xf32>
    %c0_39 = arith.constant 0 : index
    %105 = memref.load %arg5[%c0_39] : memref<1xf32, #tpu.memory_space<smem>>
    %106 = vector.broadcast %105 : f32 to vector<1x16xf32>
    %107 = arith.addf %104, %106 : vector<1x16xf32>
    %cst_40 = arith.constant 0.000000e+00 : f32
    %108 = vector.broadcast %cst_40 : f32 to vector<1x112xf32>
    %109 = tpu.concatenate %107, %108 in 1 : vector<1x16xf32>, vector<1x112xf32> -> vector<1x128xf32>
    %c0_41 = arith.constant 0 : index
    %c0_42 = arith.constant 0 : index
    %110 = vector.load %arg6[%c0_41, %c0_42] : memref<1x128xf32, #tpu.memory_space<vmem>>, vector<1x128xf32>
    tpu.vector_store %arg6[%c0_41, %c0_42], %109 {strides = array<i32>} : memref<1x128xf32, #tpu.memory_space<vmem>>, vector<1x128xf32>,
    return
  }
  func.func @transform_0(%arg0: i32, %arg1: memref<16xi32, #tpu.memory_space<smem>>) -> (i32, i32) {
    %c0_i32 = arith.constant 0 : i32
    %c0_i32_0 = arith.constant 0 : i32
    %c0_i32_1 = arith.constant 0 : i32
    return %c0_i32, %c0_i32_0 : i32, i32
  }
  func.func @transform_1(%arg0: i32, %arg1: memref<16xi32, #tpu.memory_space<smem>>) -> (i32, i32) {
    %c0_i32 = arith.constant 0 : i32
    %c0_i32_0 = arith.constant 0 : i32
    %c0_i32_1 = arith.constant 0 : i32
    return %c0_i32, %c0_i32_0 : i32, i32
  }
  func.func @transform_2(%arg0: i32, %arg1: memref<16xi32, #tpu.memory_space<smem>>) -> (i32, i32) {
    %c0_i32 = arith.constant 0 : i32
    %c0_i32_0 = arith.constant 0 : i32
    %c0_i32_1 = arith.constant 0 : i32
    return %c0_i32, %c0_i32_0 : i32, i32
  }
  func.func @transform_3(%arg0: i32, %arg1: memref<16xi32, #tpu.memory_space<smem>>) -> i32 {
    %c0_i32 = arith.constant 0 : i32
    %c0_i32_0 = arith.constant 0 : i32
    return %c0_i32 : i32
  }
  func.func @transform_4(%arg0: i32, %arg1: memref<16xi32, #tpu.memory_space<smem>>) -> (i32, i32) {
    %c0_i32 = arith.constant 0 : i32
    %c0_i32_0 = arith.constant 0 : i32
    return %arg0, %c0_i32 : i32, i32
  }
}

</mosaic_0001>

<llo_original>
// kernel: tpu_custom_call.1
$region0: #{tpu_custom_call.1}
  #allocation0 [shape = 'u32[]', space=smem, size = 0x4, offset = 0x4, fixed_abs, tag = 'smem constant byte address 0x4 - core index']
  #allocation1 [shape = 'u32[144,128]{1,0:T(1,128)}', space=vmem, size = 0x12000, scoped, tag = 'internal scratch']
  #allocation2 [shape = 'f32[16,128]{1,0:T(8,128)}', space=vmem, size = 0x2000, scoped, tag = 'scratch operand']
  #allocation3 [shape = 's32[1]{0}', space=sflag, size = 0x4, scoped, tag = 'scoped memory for tpu_custom_call.1']
  #allocation4 [shape = 'u8[512]{0}', space=smem, size = 0x200, scoped, tag = 'prefetched SMEM operand 0']
  #allocation5 [shape = 'f32[1]{0:T(128)S(6)}', space=smem, size = 0x200, scoped, tag = 'scoped memory for tpu_custom_call.1']
  %s0 = inlined_call_operand.vmem [shape: s32[16], index: 0, kind: input, shape index: {}]
  %s1 = inlined_call_operand.hbm [shape: f32[64,128], index: 1, kind: input, shape index: {}]
  %s2 = inlined_call_operand.hbm [shape: bf16[128,128], index: 2, kind: input, shape index: {}]
  %s3 = inlined_call_operand.vmem [shape: f32[8,128], index: 3, kind: input, shape index: {}]
  %s4 = inlined_call_operand.<no memory space> [shape: f32[1], index: 4, kind: input, shape index: {}]
  %s5 = inlined_call_operand.hbm [shape: f32[1,128], index: 5, kind: output, shape index: {}]
  %s6 = sld [smem:[#allocation0]]
  $region34: #{tpu_custom_call.1} parent=0
    _
  %s8 = ssub.s32 1, %s6
  %s9 = scalar_select 0, %s8, %s6
  %s10 = sshll.u32 %s0, 4
  %s11 = int_to_ptr.vmem [resolvable:$true] %s10
  %13 = dma.vmem_to_smem %s11, 16, [#allocation4], [#allocation3]
  %14 = sst [smem:[#allocation5]] %s4
  %15 = dma.done [#allocation3], 16
  %16 = sfence
  $region1: #{tpu_custom_call.1} parent=0
    #allocation6 [shape = 'u8[32768]{0}', space=vmem, size = 0x8000, scoped, tag = 'input window, operand 1, single buffered']
    #allocation7 [shape = 's32[1]{0}', space=sflag, size = 0x4, scoped, tag = 'scoped memory for tpu_custom_call.1']
    #allocation8 [shape = 's32[1]{0}', space=sflag, size = 0x4, scoped, tag = 'scoped memory for tpu_custom_call.1']
    #allocation9 [shape = 'u8[32768]{0}', space=vmem, size = 0x8000, scoped, tag = 'input window, operand 2, single buffered']
    #allocation10 [shape = 's32[1]{0}', space=sflag, size = 0x4, scoped, tag = 'scoped memory for tpu_custom_call.1']
    #allocation11 [shape = 'u8[512]{0}', space=vmem, size = 0x400, scoped, tag = 'output window, operand 0, single buffered']
    %17 = vsyncpa [#allocation7], 0
    %18 = vsyncpa [#allocation10], 0
    %19 = vsyncpa [#allocation8], 0
    // Predicated region
    $region2: #{tpu_custom_call.1} parent=1 // pred_check
      _
    $region3: #{tpu_custom_call.1} parent=1 // pred_check_branch
      %21 = sbr.rel (0) target = $region5
    $region4: #{tpu_custom_call.1} parent=1 // pred_region
      %s23 = ssub.s32 1024, 1024
      %24 = vsyncadd [#allocation7], %s23
      %s25 = sshll.u32 [#allocation6], 4
      %s26 = int_to_ptr.vmem [resolvable:$true] %s25
      %31 = dma.hbm_to_vmem [thread:$0]  %s1, 1024, %s26, [#allocation7], 128, 128, 8
    $region5: #{tpu_custom_call.1} parent=1 // pred_fallthru
      _
    // Predicated region
    $region6: #{tpu_custom_call.1} parent=1 // pred_check
      _
    $region7: #{tpu_custom_call.1} parent=1 // pred_check_branch
      %33 = sbr.rel (0) target = $region9
    $region8: #{tpu_custom_call.1} parent=1 // pred_region
      %s35 = ssub.s32 1024, 1024
      %36 = vsyncadd [#allocation10], %s35
      %s37 = sshll.u32 [#allocation9], 4
      %s38 = int_to_ptr.vmem [resolvable:$true] %s37
      %43 = dma.hbm_to_vmem [thread:$0]  %s2, 1024, %s38, [#allocation10], 64, 64, 4
    $region9: #{tpu_custom_call.1} parent=1 // pred_fallthru
      _
    // Predicated region
    $region10: #{tpu_custom_call.1} parent=1 // pred_check
      _
    $region11: #{tpu_custom_call.1} parent=1 // pred_check_branch
      %45 = sbr.rel (0) target = $region13
    $region12: #{tpu_custom_call.1} parent=1 // pred_region
      _
    $region13: #{tpu_custom_call.1} parent=1 // pred_fallthru
      _
    // Predicated region
    $region14: #{tpu_custom_call.1} parent=1 // pred_check
      _
    $region15: #{tpu_custom_call.1} parent=1 // pred_check_branch
      %47 = sbr.rel (0) target = $region17
    $region16: #{tpu_custom_call.1} parent=1 // pred_region
      _
    $region17: #{tpu_custom_call.1} parent=1 // pred_fallthru
      _
    // Predicated region
    $region18: #{tpu_custom_call.1} parent=1 // pred_check
      _
    $region19: #{tpu_custom_call.1} parent=1 // pred_check_branch
      %49 = sbr.rel (0) target = $region21
    $region20: #{tpu_custom_call.1} parent=1 // pred_region
      %50 = dma.done [#allocation7], 1024
    $region21: #{tpu_custom_call.1} parent=1 // pred_fallthru
      _
    // Predicated region
    $region22: #{tpu_custom_call.1} parent=1 // pred_check
      _
    $region23: #{tpu_custom_call.1} parent=1 // pred_check_branch
      %52 = sbr.rel (0) target = $region25
    $region24: #{tpu_custom_call.1} parent=1 // pred_region
      %53 = dma.done [#allocation10], 1024
    $region25: #{tpu_custom_call.1} parent=1 // pred_fallthru
      _
    %s55 = smul.u32 0, 16
    %s56 = sld [smem:[#allocation4 + %s55]]
    %s57 = scalar_lea.vmem [#allocation6], %s56
    %v58 = vld [vmem:[%s57] sm:$0x1]
    %59 = vst [vmem:[#allocation2] sm:$0x1] %v58
    %s60 = sadd.s32 %s55, 1
    %s61 = sld [smem:[#allocation4 + %s60]]
    %s62 = scalar_lea.vmem [#allocation6], %s61
    %v63 = vld [vmem:[%s62] sm:$0x1]
    %64 = vst [vmem:[#allocation2 + $0x1] sm:$0x1] %v63
    %s65 = sadd.s32 %s55, 2
    %s66 = sld [smem:[#allocation4 + %s65]]
    %s67 = scalar_lea.vmem [#allocation6], %s66
    %v68 = vld [vmem:[%s67] sm:$0x1]
    %69 = vst [vmem:[#allocation2 + $0x2] sm:$0x1] %v68
    %s70 = sadd.s32 %s55, 3
    %s71 = sld [smem:[#allocation4 + %s70]]
    %s72 = scalar_lea.vmem [#allocation6], %s71
    %v73 = vld [vmem:[%s72] sm:$0x1]
    %74 = vst [vmem:[#allocation2 + $0x3] sm:$0x1] %v73
    %s75 = sadd.s32 %s55, 4
    %s76 = sld [smem:[#allocation4 + %s75]]
    %s77 = scalar_lea.vmem [#allocation6], %s76
    %v78 = vld [vmem:[%s77] sm:$0x1]
    %79 = vst [vmem:[#allocation2 + $0x4] sm:$0x1] %v78
    %s80 = sadd.s32 %s55, 5
    %s81 = sld [smem:[#allocation4 + %s80]]
    %s82 = scalar_lea.vmem [#allocation6], %s81
    %v83 = vld [vmem:[%s82] sm:$0x1]
    %84 = vst [vmem:[#allocation2 + $0x5] sm:$0x1] %v83
    %s85 = sadd.s32 %s55, 6
    %s86 = sld [smem:[#allocation4 + %s85]]
    %s87 = scalar_lea.vmem [#allocation6], %s86
    %v88 = vld [vmem:[%s87] sm:$0x1]
    %89 = vst [vmem:[#allocation2 + $0x6] sm:$0x1] %v88
    %s90 = sadd.s32 %s55, 7
    %s91 = sld [smem:[#allocation4 + %s90]]
    %s92 = scalar_lea.vmem [#allocation6], %s91
    %v93 = vld [vmem:[%s92] sm:$0x1]
    %94 = vst [vmem:[#allocation2 + $0x7] sm:$0x1] %v93
    %s95 = sadd.s32 %s55, 8
    %s96 = sld [smem:[#allocation4 + %s95]]
    %s97 = scalar_lea.vmem [#allocation6], %s96
    %v98 = vld [vmem:[%s97] sm:$0x1]
    %99 = vst [vmem:[#allocation2 + $0x8] sm:$0x1] %v98
    %s100 = sadd.s32 %s55, 9
    %s101 = sld [smem:[#allocation4 + %s100]]
    %s102 = scalar_lea.vmem [#allocation6], %s101
    %v103 = vld [vmem:[%s102] sm:$0x1]
    %104 = vst [vmem:[#allocation2 + $0x9] sm:$0x1] %v103
    %s105 = sadd.s32 %s55, 10
    %s106 = sld [smem:[#allocation4 + %s105]]
    %s107 = scalar_lea.vmem [#allocation6], %s106
    %v108 = vld [vmem:[%s107] sm:$0x1]
    %109 = vst [vmem:[#allocation2 + $0xa] sm:$0x1] %v108
    %s110 = sadd.s32 %s55, 11
    %s111 = sld [smem:[#allocation4 + %s110]]
    %s112 = scalar_lea.vmem [#allocation6], %s111
    %v113 = vld [vmem:[%s112] sm:$0x1]
    %114 = vst [vmem:[#allocation2 + $0xb] sm:$0x1] %v113
    %s115 = sadd.s32 %s55, 12
    %s116 = sld [smem:[#allocation4 + %s115]]
    %s117 = scalar_lea.vmem [#allocation6], %s116
    %v118 = vld [vmem:[%s117] sm:$0x1]
    %119 = vst [vmem:[#allocation2 + $0xc] sm:$0x1] %v118
    %s120 = sadd.s32 %s55, 13
    %s121 = sld [smem:[#allocation4 + %s120]]
    %s122 = scalar_lea.vmem [#allocation6], %s121
    %v123 = vld [vmem:[%s122] sm:$0x1]
    %124 = vst [vmem:[#allocation2 + $0xd] sm:$0x1] %v123
    %s125 = sadd.s32 %s55, 14
    %s126 = sld [smem:[#allocation4 + %s125]]
    %s127 = scalar_lea.vmem [#allocation6], %s126
    %v128 = vld [vmem:[%s127] sm:$0x1]
    %129 = vst [vmem:[#allocation2 + $0xe] sm:$0x1] %v128
    %s130 = sadd.s32 %s55, 15
    %s131 = sld [smem:[#allocation4 + %s130]]
    %s132 = scalar_lea.vmem [#allocation6], %s131
    %v133 = vld [vmem:[%s132] sm:$0x1]
    %134 = vst [vmem:[#allocation2 + $0xf] sm:$0x1] %v133
    %v135 = vld [vmem:[#allocation2] sm:$0xff]
    %v136 = vld [vmem:[#allocation2 + $0x8] sm:$0xff]
    %v137 = vpack.c.bf16 %v136, %v135
    %v138 = vld [vmem:[#allocation9] sm:$0xf]
    %v139 = vld [vmem:[#allocation9 + $0x4] sm:$0xf]
    %v140 = vld [vmem:[#allocation9 + $0x8] sm:$0xf]
    %v141 = vld [vmem:[#allocation9 + $0xc] sm:$0xf]
    %v142 = vld [vmem:[#allocation9 + $0x10] sm:$0xf]
    %v143 = vld [vmem:[#allocation9 + $0x14] sm:$0xf]
    %v144 = vld [vmem:[#allocation9 + $0x18] sm:$0xf]
    %v145 = vld [vmem:[#allocation9 + $0x1c] sm:$0xf]
    %v146 = vld [vmem:[#allocation9 + $0x20] sm:$0xf]
    %v147 = vld [vmem:[#allocation9 + $0x24] sm:$0xf]
    %v148 = vld [vmem:[#allocation9 + $0x28] sm:$0xf]
    %v149 = vld [vmem:[#allocation9 + $0x2c] sm:$0xf]
    %v150 = vld [vmem:[#allocation9 + $0x30] sm:$0xf]
    %v151 = vld [vmem:[#allocation9 + $0x34] sm:$0xf]
    %v152 = vld [vmem:[#allocation9 + $0x38] sm:$0xf]
    %v153 = vld [vmem:[#allocation9 + $0x3c] sm:$0xf]
    %v170 = vunpack.c.l.b16 %v138
    %v171 = vunpack.c.l.b16 %v139
    %v172 = vunpack.c.l.b16 %v140
    %v173 = vunpack.c.l.b16 %v141
    %v174 = vunpack.c.l.b16 %v142
    %v175 = vunpack.c.l.b16 %v143
    %v176 = vunpack.c.l.b16 %v144
    %v177 = vunpack.c.l.b16 %v145
    %v178 = vunpack.c.l.b16 %v146
    %v179 = vunpack.c.l.b16 %v147
    %v180 = vunpack.c.l.b16 %v148
    %v181 = vunpack.c.l.b16 %v149
    %v182 = vunpack.c.l.b16 %v150
    %v183 = vunpack.c.l.b16 %v151
    %v184 = vunpack.c.l.b16 %v152
    %v185 = vunpack.c.l.b16 %v153
    %v186 = vpack.c.b16 %v171, %v170
    %v187 = vpack.c.b16 %v173, %v172
    %v188 = vpack.c.b16 %v175, %v174
    %v189 = vpack.c.b16 %v177, %v176
    %v190 = vpack.c.b16 %v179, %v178
    %v191 = vpack.c.b16 %v181, %v180
    %v192 = vpack.c.b16 %v183, %v182
    %v193 = vpack.c.b16 %v185, %v184
    %202 = vmatprep.subr.bf16.mxu0 0
    %203 = vmatpush1.bf16.msra.mxu0 %v186
    %204 = vmatprep.subr.bf16.mxu0 0
    %205 = vmatpush1.bf16.msra.mxu0 %v187
    %206 = vmatprep.subr.bf16.mxu0 0
    %207 = vmatpush1.bf16.msra.mxu0 %v188
    %208 = vmatprep.subr.bf16.mxu0 0
    %209 = vmatpush1.bf16.msra.mxu0 %v189
    %210 = vmatprep.subr.bf16.mxu0 0
    %211 = vmatpush1.bf16.msra.mxu0 %v190
    %212 = vmatprep.subr.bf16.mxu0 0
    %213 = vmatpush1.bf16.msra.mxu0 %v191
    %214 = vmatprep.subr.bf16.mxu0 0
    %215 = vmatpush1.bf16.msra.mxu0 %v192
    %216 = vmatprep.subr.bf16.mxu0 0
    %217 = vmatpush1.bf16.msra.mxu0 %v193
    %218 = vmatprep.subr.bf16.mxu0 0
    %219 = vmatpush1.bf16.msra.mxu0 0
    %220 = vmatprep.subr.bf16.mxu0 0
    %221 = vmatpush1.bf16.msra.mxu0 0
    %222 = vmatprep.subr.bf16.mxu0 0
    %223 = vmatpush1.bf16.msra.mxu0 0
    %224 = vmatprep.subr.bf16.mxu0 0
    %225 = vmatpush1.bf16.msra.mxu0 0
    %226 = vmatprep.subr.bf16.mxu0 0
    %227 = vmatpush1.bf16.msra.mxu0 0
    %228 = vmatprep.subr.bf16.mxu0 0
    %229 = vmatpush1.bf16.msra.mxu0 0
    %230 = vmatprep.subr.bf16.mxu0 0
    %231 = vmatpush1.bf16.msra.mxu0 0
    %232 = vmatprep.subr.bf16.mxu0 0
    %233 = vmatpush1.bf16.msra.mxu0 0
    %234 = vmatprep.mubr.bf16.mxu0 0
    %235 = vmatmul.mubr.bf16.gmra.mrb[0].mxu0 %v137
    %v236 = vpop.f32.mrb[0].mxu0
    %v237 = vadd.f32 0.0, %v236
    %v238 = vpop.f32.mrb[0].mxu0
    %v239 = vpop.f32.mrb[0].mxu0
    %v240 = vadd.f32 0.0, %v239
    %v241 = vpop.f32.mrb[0].mxu0
    %242 = vdwg.mxu0
    %v243 = vtanh.pop %v237
    %v244 = vtanh.pop %v240
    %v245 = vld [vmem:[%s3] sm:$0xff]
    %246 = vmatprep.subr.mxu0 0.0
    %247 = vmatpush1.xpose.msra.mxu0 %v243
    %248 = vmatprep.subr.mxu0 0.0
    %249 = vmatpush1.xpose.msra.mxu0 %v244
    %250 = vmatprep.subr.mxu0 0.0
    %251 = vmatpush1.xpose.msra.mxu0 0.0
    %252 = vmatprep.subr.mxu0 0.0
    %253 = vmatpush1.xpose.msra.mxu0 0.0
    %254 = vmatprep.subr.mxu0 0.0
    %255 = vmatpush1.xpose.msra.mxu0 0.0
    %256 = vmatprep.subr.mxu0 0.0
    %257 = vmatpush1.xpose.msra.mxu0 0.0
    %258 = vmatprep.subr.mxu0 0.0
    %259 = vmatpush1.xpose.msra.mxu0 0.0
    %260 = vmatprep.subr.mxu0 0.0
    %261 = vmatpush1.xpose.msra.mxu0 0.0
    %262 = vmatprep.subr.mxu0 0.0
    %263 = vmatpush1.xpose.msra.mxu0 0.0
    %264 = vmatprep.subr.mxu0 0.0
    %265 = vmatpush1.xpose.msra.mxu0 0.0
    %266 = vmatprep.subr.mxu0 0.0
    %267 = vmatpush1.xpose.msra.mxu0 0.0
    %268 = vmatprep.subr.mxu0 0.0
    %269 = vmatpush1.xpose.msra.mxu0 0.0
    %270 = vmatprep.subr.mxu0 0.0
    %271 = vmatpush1.xpose.msra.mxu0 0.0
    %272 = vmatprep.subr.mxu0 0.0
    %273 = vmatpush1.xpose.msra.mxu0 0.0
    %274 = vmatprep.subr.mxu0 0.0
    %275 = vmatpush1.xpose.msra.mxu0 0.0
    %276 = vmatprep.subr.mxu0 0.0
    %277 = vmatpush1.xpose.msra.mxu0 0.0
    %278 = vmatprep.subr.mxu0 0.0
    %279 = vmatpush1.xpose.msra.mxu0 0.0
    %280 = vmatprep.subr.mxu0 0.0
    %281 = vmatpush1.xpose.msra.mxu0 0.0
    %282 = vmatprep.subr.mxu0 0.0
    %283 = vmatpush1.xpose.msra.mxu0 0.0
    %284 = vmatprep.subr.mxu0 0.0
    %285 = vmatpush1.xpose.msra.mxu0 0.0
    %286 = vmatprep.subr.mxu0 0.0
    %287 = vmatpush1.xpose.msra.mxu0 0.0
    %288 = vmatprep.subr.mxu0 0.0
    %289 = vmatpush1.xpose.msra.mxu0 0.0
    %290 = vmatprep.subr.mxu0 0.0
    %291 = vmatpush1.xpose.msra.mxu0 0.0
    %292 = vmatprep.subr.mxu0 0.0
    %293 = vmatpush1.xpose.msra.mxu0 0.0
    %294 = vmatprep.subr.mxu0 0.0
    %295 = vmatpush1.xpose.msra.mxu0 0.0
    %296 = vmatprep.subr.mxu0 0.0
    %297 = vmatpush1.xpose.msra.mxu0 0.0
    %298 = vmatprep.subr.mxu0 0.0
    %299 = vmatpush1.xpose.msra.mxu0 0.0
    %300 = vmatprep.subr.mxu0 0.0
    %301 = vmatpush1.xpose.msra.mxu0 0.0
    %302 = vmatprep.subr.mxu0 0.0
    %303 = vmatpush1.xpose.msra.mxu0 0.0
    %304 = vmatprep.subr.mxu0 0.0
    %305 = vmatpush1.xpose.msra.mxu0 0.0
    %306 = vmatprep.subr.mxu0 0.0
    %307 = vmatpush1.xpose.msra.mxu0 0.0
    %308 = vmatprep.subr.mxu0 0.0
    %309 = vmatpush1.xpose.msra.mxu0 0.0
    %310 = vmatprep.mubr.f32.mxu0 0.0
    %311 = vmatmul.mubr.f32.gmra.mrb[0].mxu0 %v245
    %v312 = vpop.f32.mrb[0].mxu0
    %v313 = vadd.f32 0.0, %v312
    %v314 = vpop.f32.mrb[0].mxu0
    %315 = vdwg.mxu0
    %s316 = sld [smem:[#allocation5]]
    %v317 = vstv %s316
    %v318 = vadd.f32 %v313, %v317
    %vm319 = vcmask 130048
    %v320 = vsel %vm319, %v318, 0.0
    %321 = vst [vmem:[#allocation11] sm:$0x1] %v320
    // Predicated region
    $region26: #{tpu_custom_call.1} parent=1 // pred_check
      _
    $region27: #{tpu_custom_call.1} parent=1 // pred_check_branch
      %323 = sbr.rel (0) target = $region29
    $region28: #{tpu_custom_call.1} parent=1 // pred_region
      %s325 = ssub.s32 16, 16
      %326 = vsyncadd [#allocation8], %s325
      %s328 = sshll.u32 [#allocation11], 4
      %s329 = int_to_ptr.vmem [resolvable:$true] %s328
      %331 = dma.vmem_to_hbm [thread:$0]  %s329, 16, %s5, [#allocation8]
    $region29: #{tpu_custom_call.1} parent=1 // pred_fallthru
      _
    // Predicated region
    $region30: #{tpu_custom_call.1} parent=1 // pred_check
      _
    $region31: #{tpu_custom_call.1} parent=1 // pred_check_branch
      %333 = sbr.rel (0) target = $region33
    $region32: #{tpu_custom_call.1} parent=1 // pred_region
      %334 = dma.done [#allocation8], 16
    $region33: #{tpu_custom_call.1} parent=1 // pred_fallthru
      _
    %335 = vsyncpa [#allocation7], 1
    %336 = vsyncpa [#allocation10], 1
    %337 = vsyncpa [#allocation8], 1

</llo_original>
